<compile_context>
chip_gen: v7x
topology: tpu7x:2x2x1
jax: 0.10.0
libtpu: 0.0.40
codegen_flags: <defaults>
</compile_context>

<pallas_src>
import functools

import jax
import jax.numpy as jnp
from jax.experimental import pallas as pl
from jax.experimental.pallas import tpu as pltpu


def _round_up(n, m):
    return ((n + m - 1) // m) * m


def _mlp_kernel(x_ref, w1_ref, b1_ref, w2_ref, b2_ref, o_ref):
    # x_ref : (TILE_B, D)  compute dtype (bf16 or f32)
    # w1_ref: (D, Hp)      compute dtype        b1_ref: (1, Hp) f32
    # w2_ref: (Hp, Op)     compute dtype        b2_ref: (1, Op) f32
    # o_ref : (TILE_B, Op) f32 (lane-dense: Op is a multiple of 128)
    h = jnp.dot(x_ref[...], w1_ref[...], preferred_element_type=jnp.float32)
    h = jnp.maximum(h + b1_ref[...], 0.0)          # bias + ReLU in f32 (v5e-safe)
    y = jnp.dot(h.astype(w2_ref.dtype), w2_ref[...],
                preferred_element_type=jnp.float32)
    o_ref[...] = (y + b2_ref[...]).astype(o_ref.dtype)


@functools.partial(jax.jit, static_argnames=("tile_b", "compute_dtype"))
def mlp_base_forward(x, w1, b1, w2, b2, *, tile_b=256,
                     compute_dtype=jnp.bfloat16):
    """x: (B, C, L) f32; w1: (L*C, H); b1: (H,); w2: (H, O); b2: (O,).

    Returns (B, O) f32, equal to
        relu(x.permute(0,2,1).reshape(B,-1) @ w1 + b1) @ w2 + b2
    """
    B, C, L = x.shape
    D = C * L
    H = w1.shape[1]
    O = w2.shape[1]
    assert w1.shape[0] == D and w2.shape[0] == H

    # ---- Fold the permute(0,2,1) into a one-time weight row reorder ---------
    #   x.permute(0,2,1).reshape(B, L*C) @ w1  ==  x.reshape(B, C*L) @ w1p
    # with w1p[c*L + l, :] = w1[l*C + c, :].  (Weight-only op; the activation
    # reshape below is a free row-major view -- no HBM round-trip.)
    w1p = jnp.transpose(w1.reshape(L, C, H), (1, 0, 2)).reshape(C * L, H)
    x2d = x.reshape(B, D)

    # ---- Pad feature dims to the 128-lane grain (weights/biases only) -------
    Hp = _round_up(H, 128)
    Op = _round_up(O, 128)
    w1p = jnp.pad(w1p, ((0, 0), (0, Hp - H)))
    b1p = jnp.pad(b1, (0, Hp - H)).reshape(1, Hp).astype(jnp.float32)
    w2p = jnp.pad(w2, ((0, Hp - H), (0, Op - O)))
    b2p = jnp.pad(b2, (0, Op - O)).reshape(1, Op).astype(jnp.float32)

    # ---- Batch tiling (sublane-aligned) --------------------------------------
    tile = min(tile_b, _round_up(B, 8))
    Bp = _round_up(B, tile)
    if Bp != B:
        x2d = jnp.pad(x2d, ((0, Bp - B), (0, 0)))
    grid = (Bp // tile,)

    # ---- VMEM budget: resident weights + double-buffered activation tiles ---
    cd_bytes = jnp.dtype(compute_dtype).itemsize
    est = 2 * (tile * D * cd_bytes            # x tile (double-buffered)
               + D * Hp * cd_bytes            # w1 (resident, conservatively x2)
               + Hp * Op * cd_bytes           # w2
               + (Hp + Op) * 4                # biases
               + tile * Op * 4)               # output tile
    est += tile * Hp * 4                      # f32 hidden intermediate
    vmem_limit = int(min(max(32 * 1024 * 1024, 2 * est), 60 * 1024 * 1024))

    out = pl.pallas_call(
        _mlp_kernel,
        out_shape=jax.ShapeDtypeStruct((Bp, Op), jnp.float32),
        grid_spec=pltpu.PrefetchScalarGridSpec(
            num_scalar_prefetch=0,
            grid=grid,
            in_specs=[
                pl.BlockSpec((tile, D), lambda i: (i, 0)),   # activation tile
                pl.BlockSpec((D, Hp), lambda i: (0, 0)),     # w1 resident
                pl.BlockSpec((1, Hp), lambda i: (0, 0)),     # b1 resident
                pl.BlockSpec((Hp, Op), lambda i: (0, 0)),    # w2 resident
                pl.BlockSpec((1, Op), lambda i: (0, 0)),     # b2 resident
            ],
            out_specs=pl.BlockSpec((tile, Op), lambda i: (i, 0)),
        ),
        compiler_params=pltpu.CompilerParams(
            dimension_semantics=("parallel",),
            vmem_limit_bytes=vmem_limit,
        ),
    )(x2d.astype(compute_dtype),
      w1p.astype(compute_dtype),
      b1p,
      w2p.astype(compute_dtype),
      b2p)

    return out[:B, :O]


def _reference(x, w1, b1, w2, b2):
    B = x.shape[0]
    x2d = jnp.transpose(x, (0, 2, 1)).reshape(B, -1)   # PyTorch semantics
    h = jnp.maximum(x2d @ w1 + b1, 0.0)
    return h @ w2 + b2


if __name__ == "__main__":
    # Small shapes consistent with the forward: x is (B, C, L); flattened
    # feature dim D = L*C is the in_features of the first Linear.
    B, C, L = 2, 4, 8
    D = C * L          # 32 = in_features of first Linear
    H = 32             # hidden
    O = 16             # output

    key = jax.random.PRNGKey(0)
    kx, k1, kb1, k2, kb2 = jax.random.split(key, 5)

    x = jax.random.normal(kx, (B, C, L), dtype=jnp.float32)

    # Deterministic "PyTorch-style" uniform(-1/sqrt(fan_in), 1/sqrt(fan_in)).
    lim1 = 1.0 / jnp.sqrt(jnp.float32(D))
    lim2 = 1.0 / jnp.sqrt(jnp.float32(H))
    w1 = jax.random.uniform(k1, (D, H), jnp.float32, -lim1, lim1)
    b1 = jax.random.uniform(kb1, (H,), jnp.float32, -lim1, lim1)
    w2 = jax.random.uniform(k2, (H, O), jnp.float32, -lim2, lim2)
    b2 = jax.random.uniform(kb2, (O,), jnp.float32, -lim2, lim2)

    ref = _reference(x, w1, b1, w2, b2)

    # Exact path (f32 matmuls) -- validates the permute-fold / padding / tiling
    # against the PyTorch-semantics reference at tight tolerance.
    out_f32 = jax.block_until_ready(
        mlp_base_forward(x, w1, b1, w2, b2, compute_dtype=jnp.float32))
    assert out_f32.shape == (B, O)
    assert jnp.allclose(out_f32, ref, atol=1e-5, rtol=1e-5), "f32 path mismatch"

    # Fast path (bf16 matmuls, f32 accumulate + epilogue) -- loose tolerance.
    out_bf16 = jax.block_until_ready(
        mlp_base_forward(x, w1, b1, w2, b2, compute_dtype=jnp.bfloat16))
    assert out_bf16.shape == (B, O)
    assert jnp.allclose(out_bf16, ref, atol=5e-2, rtol=5e-2), "bf16 path mismatch"

    print("KERNEL_OK")
</pallas_src>

<mosaic_0001>
module attributes {stable_mosaic.version = 11 : i64} {
  func.func @_mlp_kernel(%arg0: i32, %arg1: memref<8x32xf32, #tpu.memory_space<vmem>>, %arg2: memref<32x128xf32, #tpu.memory_space<vmem>>, %arg3: memref<1x128xf32, #tpu.memory_space<vmem>>, %arg4: memref<128x128xf32, #tpu.memory_space<vmem>>, %arg5: memref<1x128xf32, #tpu.memory_space<vmem>>, %arg6: memref<8x128xf32, #tpu.memory_space<vmem>>) attributes {dimension_semantics = [#tpu.dimension_semantics<parallel>], iteration_bounds = array<i64: 1>, scalar_prefetch = 0 : i64, scratch_operands = 0 : i64, tpu.core_type = #tpu.core_type<tc>, window_params = [{transform_indices = @transform_0, window_bounds = array<i64: 8, 32>}, {pipeline_mode = #tpu.pipeline_mode<synchronous>, transform_indices = @transform_1, window_bounds = array<i64: 32, 128>}, {pipeline_mode = #tpu.pipeline_mode<synchronous>, transform_indices = @transform_2, window_bounds = array<i64: 1, 128>}, {pipeline_mode = #tpu.pipeline_mode<synchronous>, transform_indices = @transform_3, window_bounds = array<i64: 128, 128>}, {pipeline_mode = #tpu.pipeline_mode<synchronous>, transform_indices = @transform_4, window_bounds = array<i64: 1, 128>}, {transform_indices = @transform_5, window_bounds = array<i64: 8, 128>}]} {
    %c0 = arith.constant 0 : index
    %c0_0 = arith.constant 0 : index
    %0 = vector.load %arg1[%c0, %c0_0] : memref<8x32xf32, #tpu.memory_space<vmem>>, vector<8x32xf32>
    %c0_1 = arith.constant 0 : index
    %c0_2 = arith.constant 0 : index
    %1 = vector.load %arg2[%c0_1, %c0_2] : memref<32x128xf32, #tpu.memory_space<vmem>>, vector<32x128xf32>
    %cst = arith.constant dense<0.000000e+00> : vector<8x128xf32>
    %2 = tpu.matmul %0, %1, %cst {dimension_numbers = #tpu.dot_dimension_numbers<[1], [0], [0], [1], [0, 0, 1, 1], [], []>} : vector<8x32xf32>, vector<32x128xf32>, vector<8x128xf32> -> vector<8x128xf32>
    %c0_3 = arith.constant 0 : index
    %c0_4 = arith.constant 0 : index
    %3 = vector.load %arg3[%c0_3, %c0_4] : memref<1x128xf32, #tpu.memory_space<vmem>>, vector<1x128xf32>
    %4 = vector.broadcast %3 : vector<1x128xf32> to vector<8x128xf32>
    %5 = arith.addf %2, %4 : vector<8x128xf32>
    %cst_5 = arith.constant 0.000000e+00 : f32
    %6 = vector.broadcast %cst_5 : f32 to vector<8x128xf32>
    %7 = arith.maximumf %5, %6 : vector<8x128xf32>
    %c0_6 = arith.constant 0 : index
    %c0_7 = arith.constant 0 : index
    %8 = vector.load %arg4[%c0_6, %c0_7] : memref<128x128xf32, #tpu.memory_space<vmem>>, vector<128x128xf32>
    %cst_8 = arith.constant dense<0.000000e+00> : vector<8x128xf32>
    %9 = tpu.matmul %7, %8, %cst_8 {dimension_numbers = #tpu.dot_dimension_numbers<[1], [0], [0], [1], [0, 0, 1, 1], [], []>} : vector<8x128xf32>, vector<128x128xf32>, vector<8x128xf32> -> vector<8x128xf32>
    %c0_9 = arith.constant 0 : index
    %c0_10 = arith.constant 0 : index
    %10 = vector.load %arg5[%c0_9, %c0_10] : memref<1x128xf32, #tpu.memory_space<vmem>>, vector<1x128xf32>
    %11 = vector.broadcast %10 : vector<1x128xf32> to vector<8x128xf32>
    %12 = arith.addf %9, %11 : vector<8x128xf32>
    %c0_11 = arith.constant 0 : index
    %c0_12 = arith.constant 0 : index
    %13 = vector.load %arg6[%c0_11, %c0_12] : memref<8x128xf32, #tpu.memory_space<vmem>>, vector<8x128xf32>
    tpu.vector_store %arg6[%c0_11, %c0_12], %12 {strides = array<i32>} : memref<8x128xf32, #tpu.memory_space<vmem>>, vector<8x128xf32>,
    return
  }
  func.func @transform_0(%arg0: i32) -> (i32, i32) {
    %c0_i32 = arith.constant 0 : i32
    %c0_i32_0 = arith.constant 0 : i32
    return %arg0, %c0_i32 : i32, i32
  }
  func.func @transform_1(%arg0: i32) -> (i32, i32) {
    %c0_i32 = arith.constant 0 : i32
    %c0_i32_0 = arith.constant 0 : i32
    %c0_i32_1 = arith.constant 0 : i32
    return %c0_i32, %c0_i32_0 : i32, i32
  }
  func.func @transform_2(%arg0: i32) -> (i32, i32) {
    %c0_i32 = arith.constant 0 : i32
    %c0_i32_0 = arith.constant 0 : i32
    %c0_i32_1 = arith.constant 0 : i32
    return %c0_i32, %c0_i32_0 : i32, i32
  }
  func.func @transform_3(%arg0: i32) -> (i32, i32) {
    %c0_i32 = arith.constant 0 : i32
    %c0_i32_0 = arith.constant 0 : i32
    %c0_i32_1 = arith.constant 0 : i32
    return %c0_i32, %c0_i32_0 : i32, i32
  }
  func.func @transform_4(%arg0: i32) -> (i32, i32) {
    %c0_i32 = arith.constant 0 : i32
    %c0_i32_0 = arith.constant 0 : i32
    %c0_i32_1 = arith.constant 0 : i32
    return %c0_i32, %c0_i32_0 : i32, i32
  }
  func.func @transform_5(%arg0: i32) -> (i32, i32) {
    %c0_i32 = arith.constant 0 : i32
    %c0_i32_0 = arith.constant 0 : i32
    return %arg0, %c0_i32 : i32, i32
  }
}

</mosaic_0001>

<llo_original>
// kernel: mlp_base_forward.1
$region0: #{mlp_base_forward.1}
  #allocation0 [shape = 'u32[]', space=smem, size = 0x4, offset = 0x4, fixed_abs, tag = 'smem constant byte address 0x4 - core index']
  #allocation1 [shape = 'u32[144,128]{1,0:T(1,128)}', space=vmem, size = 0x12000, scoped, tag = 'internal scratch']
  %s0 = inlined_call_operand.vmem [shape: f32[8,32], index: 0, kind: input, shape index: {}]
  %s1 = inlined_call_operand.vmem [shape: f32[32,128], index: 1, kind: input, shape index: {}]
  %s2 = inlined_call_operand.vmem [shape: f32[1,128], index: 2, kind: input, shape index: {}]
  %s3 = inlined_call_operand.vmem [shape: f32[128,128], index: 3, kind: input, shape index: {}]
  %s4 = inlined_call_operand.vmem [shape: f32[1,128], index: 4, kind: input, shape index: {}]
  %s5 = inlined_call_operand.vmem [shape: f32[8,128], index: 5, kind: output, shape index: {}]
  %s6 = sld [smem:[#allocation0]]
  $region30: #{mlp_base_forward.1} parent=0
    _
  %s8 = ssub.s32 1, %s6
  %s9 = scalar_select 0, %s8, %s6
  // Predicated region
  $region2: #{mlp_base_forward.1} parent=0 // pred_check
    _
  $region3: #{mlp_base_forward.1} parent=0 // pred_check_branch
    %11 = sbr.rel (0) target = $region5
  $region4: #{mlp_base_forward.1} parent=0 // pred_region
    _
  $region5: #{mlp_base_forward.1} parent=0 // pred_fallthru
    _
  // Predicated region
  $region6: #{mlp_base_forward.1} parent=0 // pred_check
    _
  $region7: #{mlp_base_forward.1} parent=0 // pred_check_branch
    %13 = sbr.rel (0) target = $region9
  $region8: #{mlp_base_forward.1} parent=0 // pred_region
    _
  $region9: #{mlp_base_forward.1} parent=0 // pred_fallthru
    _
  // Predicated region
  $region10: #{mlp_base_forward.1} parent=0 // pred_check
    _
  $region11: #{mlp_base_forward.1} parent=0 // pred_check_branch
    %15 = sbr.rel (0) target = $region13
  $region12: #{mlp_base_forward.1} parent=0 // pred_region
    _
  $region13: #{mlp_base_forward.1} parent=0 // pred_fallthru
    _
  // Predicated region
  $region14: #{mlp_base_forward.1} parent=0 // pred_check
    _
  $region15: #{mlp_base_forward.1} parent=0 // pred_check_branch
    %17 = sbr.rel (0) target = $region17
  $region16: #{mlp_base_forward.1} parent=0 // pred_region
    _
  $region17: #{mlp_base_forward.1} parent=0 // pred_fallthru
    _
  // Predicated region
  $region18: #{mlp_base_forward.1} parent=0 // pred_check
    _
  $region19: #{mlp_base_forward.1} parent=0 // pred_check_branch
    %19 = sbr.rel (0) target = $region21
  $region20: #{mlp_base_forward.1} parent=0 // pred_region
    _
  $region21: #{mlp_base_forward.1} parent=0 // pred_fallthru
    _
  %v20 = vld [vmem:[%s0] sm:$0xff]
  %v21 = vld [vmem:[%s1] sm:$0xff]
  %v22 = vld [vmem:[%s1 + $0x8] sm:$0xff]
  %v23 = vld [vmem:[%s1 + $0x10] sm:$0xff]
  %v24 = vld [vmem:[%s1 + $0x18] sm:$0xff]
  %v25 = vld [vmem:[%s2] sm:$0x1]
  %v27 = vlaneseq
  %v28 = vshrl.u32 %v27, 7
  %v29 = vsub.s32 0, %v28
  %v30 = vrot.slane %v25, %v29
  %vm32 = vcmask 261120
  %v34 = vsel %vm32, %v20, 0
  %36 = vmatprep.subr.mxu0 0.0
  %37 = vmatpush1.msra.mxu0 %v21
  %38 = vmatprep.subr.mxu0 0.0
  %39 = vmatpush1.msra.mxu0 %v22
  %40 = vmatprep.subr.mxu0 0.0
  %41 = vmatpush1.msra.mxu0 %v23
  %42 = vmatprep.subr.mxu0 0.0
  %43 = vmatpush1.msra.mxu0 %v24
  %44 = vmatprep.subr.mxu0 0.0
  %45 = vmatpush1.msra.mxu0 0.0
  %46 = vmatprep.subr.mxu0 0.0
  %47 = vmatpush1.msra.mxu0 0.0
  %48 = vmatprep.subr.mxu0 0.0
  %49 = vmatpush1.msra.mxu0 0.0
  %50 = vmatprep.subr.mxu0 0.0
  %51 = vmatpush1.msra.mxu0 0.0
  %52 = vmatprep.subr.mxu0 0.0
  %53 = vmatpush1.msra.mxu0 0.0
  %54 = vmatprep.subr.mxu0 0.0
  %55 = vmatpush1.msra.mxu0 0.0
  %56 = vmatprep.subr.mxu0 0.0
  %57 = vmatpush1.msra.mxu0 0.0
  %58 = vmatprep.subr.mxu0 0.0
  %59 = vmatpush1.msra.mxu0 0.0
  %60 = vmatprep.subr.mxu0 0.0
  %61 = vmatpush1.msra.mxu0 0.0
  %62 = vmatprep.subr.mxu0 0.0
  %63 = vmatpush1.msra.mxu0 0.0
  %64 = vmatprep.subr.mxu0 0.0
  %65 = vmatpush1.msra.mxu0 0.0
  %66 = vmatprep.subr.mxu0 0.0
  %67 = vmatpush1.msra.mxu0 0.0
  %68 = vmatprep.subr.mxu0 0.0
  %69 = vmatpush1.msra.mxu0 0.0
  %70 = vmatprep.subr.mxu0 0.0
  %71 = vmatpush1.msra.mxu0 0.0
  %72 = vmatprep.subr.mxu0 0.0
  %73 = vmatpush1.msra.mxu0 0.0
  %74 = vmatprep.subr.mxu0 0.0
  %75 = vmatpush1.msra.mxu0 0.0
  %76 = vmatprep.subr.mxu0 0.0
  %77 = vmatpush1.msra.mxu0 0.0
  %78 = vmatprep.subr.mxu0 0.0
  %79 = vmatpush1.msra.mxu0 0.0
  %80 = vmatprep.subr.mxu0 0.0
  %81 = vmatpush1.msra.mxu0 0.0
  %82 = vmatprep.subr.mxu0 0.0
  %83 = vmatpush1.msra.mxu0 0.0
  %84 = vmatprep.subr.mxu0 0.0
  %85 = vmatpush1.msra.mxu0 0.0
  %86 = vmatprep.subr.mxu0 0.0
  %87 = vmatpush1.msra.mxu0 0.0
  %88 = vmatprep.subr.mxu0 0.0
  %89 = vmatpush1.msra.mxu0 0.0
  %90 = vmatprep.subr.mxu0 0.0
  %91 = vmatpush1.msra.mxu0 0.0
  %92 = vmatprep.subr.mxu0 0.0
  %93 = vmatpush1.msra.mxu0 0.0
  %94 = vmatprep.subr.mxu0 0.0
  %95 = vmatpush1.msra.mxu0 0.0
  %96 = vmatprep.subr.mxu0 0.0
  %97 = vmatpush1.msra.mxu0 0.0
  %98 = vmatprep.subr.mxu0 0.0
  %99 = vmatpush1.msra.mxu0 0.0
  %100 = vmatprep.mubr.f32.mxu0 0.0
  %101 = vmatmul.mubr.f32.gmra.mrb[0].mxu0 %v34
  %v102 = vpop.f32.mrb[0].mxu0
  %v103 = vadd.f32 %v30, %v102
  %v104 = vpop.f32.mrb[0].mxu0
  %105 = vdwg.mxu0
  %v106 = vmax.f32 %v103, 0.0
  %v107 = vld [vmem:[%s3] sm:$0xff]
  %v108 = vld [vmem:[%s3 + $0x8] sm:$0xff]
  %v109 = vld [vmem:[%s3 + $0x10] sm:$0xff]
  %v110 = vld [vmem:[%s3 + $0x18] sm:$0xff]
  %v111 = vld [vmem:[%s3 + $0x20] sm:$0xff]
  %v112 = vld [vmem:[%s3 + $0x28] sm:$0xff]
  %v113 = vld [vmem:[%s3 + $0x30] sm:$0xff]
  %v114 = vld [vmem:[%s3 + $0x38] sm:$0xff]
  %v115 = vld [vmem:[%s3 + $0x40] sm:$0xff]
  %v116 = vld [vmem:[%s3 + $0x48] sm:$0xff]
  %v117 = vld [vmem:[%s3 + $0x50] sm:$0xff]
  %v118 = vld [vmem:[%s3 + $0x58] sm:$0xff]
  %v119 = vld [vmem:[%s3 + $0x60] sm:$0xff]
  %v120 = vld [vmem:[%s3 + $0x68] sm:$0xff]
  %v121 = vld [vmem:[%s3 + $0x70] sm:$0xff]
  %v122 = vld [vmem:[%s3 + $0x78] sm:$0xff]
  %v123 = vld [vmem:[%s4] sm:$0x1]
  %v125 = vlaneseq
  %v126 = vshrl.u32 %v125, 7
  %v127 = vsub.s32 0, %v126
  %v128 = vrot.slane %v123, %v127
  %130 = vmatprep.subr.mxu0 0.0
  %131 = vmatpush1.msra.mxu0 %v107
  %132 = vmatprep.subr.mxu0 0.0
  %133 = vmatpush1.msra.mxu0 %v108
  %134 = vmatprep.subr.mxu0 0.0
  %135 = vmatpush1.msra.mxu0 %v109
  %136 = vmatprep.subr.mxu0 0.0
  %137 = vmatpush1.msra.mxu0 %v110
  %138 = vmatprep.subr.mxu0 0.0
  %139 = vmatpush1.msra.mxu0 %v111
  %140 = vmatprep.subr.mxu0 0.0
  %141 = vmatpush1.msra.mxu0 %v112
  %142 = vmatprep.subr.mxu0 0.0
  %143 = vmatpush1.msra.mxu0 %v113
  %144 = vmatprep.subr.mxu0 0.0
  %145 = vmatpush1.msra.mxu0 %v114
  %146 = vmatprep.subr.mxu0 0.0
  %147 = vmatpush1.msra.mxu0 %v115
  %148 = vmatprep.subr.mxu0 0.0
  %149 = vmatpush1.msra.mxu0 %v116
  %150 = vmatprep.subr.mxu0 0.0
  %151 = vmatpush1.msra.mxu0 %v117
  %152 = vmatprep.subr.mxu0 0.0
  %153 = vmatpush1.msra.mxu0 %v118
  %154 = vmatprep.subr.mxu0 0.0
  %155 = vmatpush1.msra.mxu0 %v119
  %156 = vmatprep.subr.mxu0 0.0
  %157 = vmatpush1.msra.mxu0 %v120
  %158 = vmatprep.subr.mxu0 0.0
  %159 = vmatpush1.msra.mxu0 %v121
  %160 = vmatprep.subr.mxu0 0.0
  %161 = vmatpush1.msra.mxu0 %v122
  %162 = vmatprep.subr.mxu0 0.0
  %163 = vmatpush1.msra.mxu0 0.0
  %164 = vmatprep.subr.mxu0 0.0
  %165 = vmatpush1.msra.mxu0 0.0
  %166 = vmatprep.subr.mxu0 0.0
  %167 = vmatpush1.msra.mxu0 0.0
  %168 = vmatprep.subr.mxu0 0.0
  %169 = vmatpush1.msra.mxu0 0.0
  %170 = vmatprep.subr.mxu0 0.0
  %171 = vmatpush1.msra.mxu0 0.0
  %172 = vmatprep.subr.mxu0 0.0
  %173 = vmatpush1.msra.mxu0 0.0
  %174 = vmatprep.subr.mxu0 0.0
  %175 = vmatpush1.msra.mxu0 0.0
  %176 = vmatprep.subr.mxu0 0.0
  %177 = vmatpush1.msra.mxu0 0.0
  %178 = vmatprep.subr.mxu0 0.0
  %179 = vmatpush1.msra.mxu0 0.0
  %180 = vmatprep.subr.mxu0 0.0
  %181 = vmatpush1.msra.mxu0 0.0
  %182 = vmatprep.subr.mxu0 0.0
  %183 = vmatpush1.msra.mxu0 0.0
  %184 = vmatprep.subr.mxu0 0.0
  %185 = vmatpush1.msra.mxu0 0.0
  %186 = vmatprep.subr.mxu0 0.0
  %187 = vmatpush1.msra.mxu0 0.0
  %188 = vmatprep.subr.mxu0 0.0
  %189 = vmatpush1.msra.mxu0 0.0
  %190 = vmatprep.subr.mxu0 0.0
  %191 = vmatpush1.msra.mxu0 0.0
  %192 = vmatprep.subr.mxu0 0.0
  %193 = vmatpush1.msra.mxu0 0.0
  %194 = vmatprep.mubr.f32.mxu0 0.0
  %195 = vmatmul.mubr.f32.gmra.mrb[0].mxu0 %v106
  %v196 = vpop.f32.mrb[0].mxu0
  %v197 = vadd.f32 %v128, %v196
  %v198 = vpop.f32.mrb[0].mxu0
  %199 = vdwg.mxu0
  %200 = vst [vmem:[%s5] sm:$0xff] %v197
  // Predicated region
  $region22: #{mlp_base_forward.1} parent=0 // pred_check
    _
  $region23: #{mlp_base_forward.1} parent=0 // pred_check_branch
    %202 = sbr.rel (0) target = $region25
  $region24: #{mlp_base_forward.1} parent=0 // pred_region
    _
  $region25: #{mlp_base_forward.1} parent=0 // pred_fallthru
    _
  // Predicated region
  $region26: #{mlp_base_forward.1} parent=0 // pred_check
    _
  $region27: #{mlp_base_forward.1} parent=0 // pred_check_branch
    %204 = sbr.rel (0) target = $region29
  $region28: #{mlp_base_forward.1} parent=0 // pred_region
    _
  $region29: #{mlp_base_forward.1} parent=0 // pred_fallthru
    _

</llo_original>
